<compile_context>
chip_gen: v7x
topology: tpu7x:2x2x1
jax: 0.10.0
libtpu: 0.0.40
codegen_flags: <defaults>
</compile_context>

<pallas_src>
import functools

import numpy as np
import jax
import jax.numpy as jnp
from jax import lax
from jax.experimental import pallas as pl
from jax.experimental.pallas import tpu as pltpu


# ----------------------------------------------------------------------------
# Fused kernel: NB batch elements per grid step, folded into the M dimension.
#   x_ref    : (NB*H, W*Cin)        input slab (bf16), lanes = w*Cin + ci
#   w1_ref   : (3, W*Cin,  W*Cout)  banded conv1 weights (bf16), one per ky
#   b1_ref   : (1, W*Cout)          conv1 bias tiled over w positions (f32)
#   w2_ref   : (3, W*Cout, W*Cout)  banded conv2 weights (bf16)
#   b2_ref   : (1, W*Cout)
#   cdup_ref : (W*Cout, RP*Wh*Cout) 0/1 lane compaction (+RP-fold packing)
#   rsel_ref : (NB*H/(2*RP), NB*H)  0/1 row compaction (packed row r <- 2*RP*r)
#   y_ref    : (NB*H, W*Cout)       pre-pool activation (lane-dense)
#   p_ref    : (NB*H/(2*RP), RP*Wh*Cout)  pooled activation (128-lane packed)
# ----------------------------------------------------------------------------
def _down_kernel(x_ref, w1_ref, b1_ref, w2_ref, b2_ref, cdup_ref, rsel_ref,
                 y_ref, p_ref, *, H, Cout, RP):
    R = y_ref.shape[0]               # NB * H rows in this block
    WC = y_ref.shape[1]              # W * Cout lanes
    Whc = cdup_ref.shape[1] // RP    # pooled lanes per packed sub-row

    def conv3x3_relu(x_slab, w_ref, b_ref):
        # One MXU matmul per vertical tap ky; kx taps, channel mixing and the
        # width padding are folded into K via the banded weight slabs.
        s0 = jnp.dot(x_slab, w_ref[0], preferred_element_type=jnp.float32)
        s1 = jnp.dot(x_slab, w_ref[1], preferred_element_type=jnp.float32)
        s2 = jnp.dot(x_slab, w_ref[2], preferred_element_type=jnp.float32)
        # y[h] = s0[h-1] + s1[h] + s2[h+1]; per-batch masks (row % H) stop the
        # rolls from bleeding across the folded batch boundaries.
        row = lax.broadcasted_iota(jnp.int32, s1.shape, 0) % H
        up = jnp.where(row >= 1, pltpu.roll(s0, shift=1, axis=0), 0.0)
        dn = jnp.where(row <= H - 2, pltpu.roll(s2, shift=R - 1, axis=0), 0.0)
        return jnp.maximum(s1 + up + dn + b_ref[...], 0.0)

    x = x_ref[...]                                        # (R, W*Cin) bf16
    y1 = conv3x3_relu(x, w1_ref, b1_ref).astype(x.dtype)  # bf16 -> MXU-native
    y2 = conv3x3_relu(y1, w2_ref, b2_ref)                 # (R, W*Cout) f32
    y_ref[...] = y2.astype(y_ref.dtype)

    # --- 2x2 max-pool, stride 2 ---------------------------------------------
    # Pair maxima via XLU rolls + VPU max (only even-w lane groups / even rows
    # are consumed afterwards, so roll wraparound never matters).
    wpair = jnp.maximum(y2, pltpu.roll(y2, shift=WC - Cout, axis=1))
    hpair = jnp.maximum(wpair, pltpu.roll(wpair, shift=R - 1, axis=0))
    # Lane compaction (+ RP-fold duplication for the packed 128-lane layout).
    wcomp = jnp.dot(hpair, cdup_ref[...], preferred_element_type=jnp.float32)
    comb = wcomp
    if RP > 1:
        lane = lax.broadcasted_iota(jnp.int32, wcomp.shape, 1)
        for j in range(1, RP):
            shifted = pltpu.roll(wcomp, shift=R - 2 * j, axis=0)
            comb = jnp.where(lane >= j * Whc, shifted, comb)
    # Row compaction: packed output row r <- source row 2*RP*r.  Exact 0/1
    # selection, so pooling matches the stored (f32) y exactly.
    pooled = jnp.dot(rsel_ref[...], comb, preferred_element_type=jnp.float32)
    p_ref[...] = pooled.astype(p_ref.dtype)


# ----------------------------------------------------------------------------
# Host-side (trace-time) weight / selector preparation.
# ----------------------------------------------------------------------------
def _banded_weights(w_oihw, W):
    """Torch conv weight (Cout,Cin,3,3) -> (3, W*Cin, W*Cout) banded slabs.

    B[ky, xin*Cin+ci, wout*Cout+co] = w[co, ci, ky, kx] with xin = wout+kx-1;
    out-of-range taps dropped (this implements padding=1 along W for free).
    """
    Cout, Cin, KH, KW = w_oihw.shape
    sel = np.zeros((KW, W, W), np.float32)
    for kx in range(KW):
        for wo in range(W):
            xi = wo + kx - (KW // 2)
            if 0 <= xi < W:
                sel[kx, xi, wo] = 1.0
    wt = jnp.transpose(w_oihw, (2, 3, 1, 0)).astype(jnp.float32)  # (KH,KW,Cin,Cout)
    b = jnp.einsum('kxic,xaw->kaiwc', wt, jnp.asarray(sel))
    return b.reshape(KH, W * Cin, W * Cout)


def _pool_selectors(H, W, Cout, NB, RP):
    """0/1 selectors for pool compaction + lane packing (f32 -> exact)."""
    R = NB * H
    Whc = (W // 2) * Cout
    cdup = np.zeros((W * Cout, RP * Whc), np.float32)
    col = np.arange(Whc)
    p, c = col // Cout, col % Cout
    for j in range(RP):
        cdup[2 * p * Cout + c, j * Whc + col] = 1.0
    nrow = R // (2 * RP)
    rsel = np.zeros((nrow, R), np.float32)
    rsel[np.arange(nrow), 2 * RP * np.arange(nrow)] = 1.0
    return jnp.asarray(cdup), jnp.asarray(rsel)


def _pick_batch_block(N, H, max_rows=512):
    """Largest batch block (divisor of N) keeping M=NB*H <= max_rows,
    preferring >=2 grid steps (megacore) when there is batch to spare."""
    cands = [d for d in range(1, N + 1) if N % d == 0 and d * H <= max_rows]
    if not cands:
        return 1
    multi = [d for d in cands if N // d >= 2]
    return max(multi) if (multi and N > 2) else max(cands)


# ----------------------------------------------------------------------------
# Full Down.forward
# ----------------------------------------------------------------------------
@jax.jit
def down_forward(x_nchw, w1, b1, w2, b2):
    N, Cin, H, W = x_nchw.shape
    Cout = w1.shape[0]
    # TODO(synk): odd H/W — torch MaxPool2d(2) silently floors; require even.
    assert H % 2 == 0 and W % 2 == 0
    Hh, Wh = H // 2, W // 2
    Whc = Wh * Cout

    NB = _pick_batch_block(N, H)
    G = N // NB
    if G > 1 and (NB * Hh) % 8 != 0:   # keep blocks (8,128)-legal
        NB, G = N, 1

    # Pack RP pooled rows per output row so the pooled store is 128-lane dense.
    RP = 1
    if Whc % 128 != 0:
        for r in (2, 4, 8):
            if (r * Whc) % 128 == 0 and Hh % r == 0 and (
                    G == 1 or (NB * Hh) % (8 * r) == 0):
                RP = r
                break
    # TODO(synk): geometries where no RP works keep a masked (narrow) store.

    compute_dtype = jnp.bfloat16   # MXU-native on v5e/v6e/v7x; f32 accumulate

    # One boundary relayout in: NCHW -> lane-dense (N*H, W*Cin) slab.
    x_slab = jnp.transpose(x_nchw, (0, 2, 3, 1)).reshape(N * H, W * Cin)
    x_slab = x_slab.astype(compute_dtype)
    w1b = _banded_weights(w1, W).astype(compute_dtype)   # (3, W*Cin,  W*Cout)
    w2b = _banded_weights(w2, W).astype(compute_dtype)   # (3, W*Cout, W*Cout)
    b1t = jnp.tile(b1, W).reshape(1, W * Cout).astype(jnp.float32)
    b2t = jnp.tile(b2, W).reshape(1, W * Cout).astype(jnp.float32)
    cdup, rsel = _pool_selectors(H, W, Cout, NB, RP)

    kernel = functools.partial(_down_kernel, H=H, Cout=Cout, RP=RP)
    PR = (NB * H) // (2 * RP)     # packed pooled rows per grid step

    y_slab, p_slab = pl.pallas_call(
        kernel,
        out_shape=(jax.ShapeDtypeStruct((N * H, W * Cout), x_nchw.dtype),
                   jax.ShapeDtypeStruct((G * PR, RP * Whc), x_nchw.dtype)),
        grid_spec=pltpu.PrefetchScalarGridSpec(
            num_scalar_prefetch=0,
            grid=(G,),
            in_specs=[
                pl.BlockSpec((NB * H, W * Cin), lambda g: (g, 0)),
                # The operands below are grid-invariant; single-buffering them
                # (pipeline_mode=pl.Buffered(1)) would save VMEM at large W/C
                # but is left at the default here for portability.
                pl.BlockSpec((3, W * Cin, W * Cout), lambda g: (0, 0, 0)),
                pl.BlockSpec((1, W * Cout), lambda g: (0, 0)),
                pl.BlockSpec((3, W * Cout, W * Cout), lambda g: (0, 0, 0)),
                pl.BlockSpec((1, W * Cout), lambda g: (0, 0)),
                pl.BlockSpec((W * Cout, RP * Whc), lambda g: (0, 0)),
                pl.BlockSpec((PR, NB * H), lambda g: (0, 0)),
            ],
            out_specs=[
                pl.BlockSpec((NB * H, W * Cout), lambda g: (g, 0)),
                pl.BlockSpec((PR, RP * Whc), lambda g: (g, 0)),
            ],
        ),
        compiler_params=pltpu.CompilerParams(
            dimension_semantics=("parallel",)),
    )(x_slab, w1b, b1t, w2b, b2t, cdup, rsel)

    # One boundary relayout out: lane-dense slabs -> NCHW (torch convention).
    y = jnp.transpose(y_slab.reshape(N, H, W, Cout), (0, 3, 1, 2))
    p = jnp.transpose(p_slab.reshape(N, Hh, Wh, Cout), (0, 3, 1, 2))
    return p, y


# Plain-JAX reference (for correctness check only)
def ref_forward(x_nchw, w1, b1, w2, b2):
    def conv(x, w, b):
        y = jax.lax.conv_general_dilated(
            x, w, window_strides=(1, 1), padding="SAME",
            dimension_numbers=("NCHW", "OIHW", "NCHW"))
        return jax.nn.relu(y + b[None, :, None, None])
    y = conv(conv(x_nchw, w1, b1), w2, b2)
    pooled = jax.lax.reduce_window(
        y, -jnp.inf, jax.lax.max, (1, 1, 2, 2), (1, 1, 2, 2), "VALID")
    return pooled, y


if __name__ == "__main__":
    N, Cin, Cout, H, W = 2, 4, 8, 16, 16
    key = jax.random.PRNGKey(0)
    kx_, kw1, kb1, kw2, kb2 = jax.random.split(key, 5)

    x = jax.random.normal(kx_, (N, Cin, H, W), dtype=jnp.float32)
    w1 = 0.1 * jax.random.normal(kw1, (Cout, Cin, 3, 3), dtype=jnp.float32)
    b1 = 0.1 * jax.random.normal(kb1, (Cout,), dtype=jnp.float32)
    w2 = 0.1 * jax.random.normal(kw2, (Cout, Cout, 3, 3), dtype=jnp.float32)
    b2 = 0.1 * jax.random.normal(kb2, (Cout,), dtype=jnp.float32)

    pooled, pre = down_forward(x, w1, b1, w2, b2)
    jax.block_until_ready((pooled, pre))

    pooled_ref, pre_ref = ref_forward(x, w1, b1, w2, b2)
    assert pooled.shape == (N, Cout, H // 2, W // 2)
    assert pre.shape == (N, Cout, H, W)
    # bf16 MXU operands (f32 accumulation) -> slightly looser tolerance.
    assert jnp.allclose(pre, pre_ref, rtol=3e-2, atol=3e-2)
    assert jnp.allclose(pooled, pooled_ref, rtol=3e-2, atol=3e-2)

    print("KERNEL_OK")
</pallas_src>

<mosaic_0001>
module attributes {stable_mosaic.version = 11 : i64} {
  func.func @_down_kernel(%arg0: i32, %arg1: memref<32x64xbf16, #tpu.memory_space<vmem>>, %arg2: memref<3x64x128xbf16, #tpu.memory_space<vmem>>, %arg3: memref<1x128xf32, #tpu.memory_space<vmem>>, %arg4: memref<3x128x128xbf16, #tpu.memory_space<vmem>>, %arg5: memref<1x128xf32, #tpu.memory_space<vmem>>, %arg6: memref<128x128xf32, #tpu.memory_space<vmem>>, %arg7: memref<8x32xf32, #tpu.memory_space<vmem>>, %arg8: memref<32x128xf32, #tpu.memory_space<vmem>>, %arg9: memref<8x128xf32, #tpu.memory_space<vmem>>) attributes {dimension_semantics = [#tpu.dimension_semantics<parallel>], iteration_bounds = array<i64: 1>, scalar_prefetch = 0 : i64, scratch_operands = 0 : i64, tpu.core_type = #tpu.core_type<tc>, window_params = [{transform_indices = @transform_0, window_bounds = array<i64: 32, 64>}, {pipeline_mode = #tpu.pipeline_mode<synchronous>, transform_indices = @transform_1, window_bounds = array<i64: 3, 64, 128>}, {pipeline_mode = #tpu.pipeline_mode<synchronous>, transform_indices = @transform_2, window_bounds = array<i64: 1, 128>}, {pipeline_mode = #tpu.pipeline_mode<synchronous>, transform_indices = @transform_3, window_bounds = array<i64: 3, 128, 128>}, {pipeline_mode = #tpu.pipeline_mode<synchronous>, transform_indices = @transform_4, window_bounds = array<i64: 1, 128>}, {pipeline_mode = #tpu.pipeline_mode<synchronous>, transform_indices = @transform_5, window_bounds = array<i64: 128, 128>}, {pipeline_mode = #tpu.pipeline_mode<synchronous>, transform_indices = @transform_6, window_bounds = array<i64: 8, 32>}, {transform_indices = @transform_7, window_bounds = array<i64: 32, 128>}, {transform_indices = @transform_8, window_bounds = array<i64: 8, 128>}]} {
    %c0 = arith.constant 0 : index
    %c0_0 = arith.constant 0 : index
    %0 = vector.load %arg1[%c0, %c0_0] : memref<32x64xbf16, #tpu.memory_space<vmem>>, vector<32x64xbf16>
    %c0_1 = arith.constant 0 : index
    %c0_2 = arith.constant 0 : index
    %c0_3 = arith.constant 0 : index
    %1 = vector.load %arg2[%c0_1, %c0_2, %c0_3] : memref<3x64x128xbf16, #tpu.memory_space<vmem>>, vector<1x64x128xbf16>
    %2 = vector.shape_cast %1 : vector<1x64x128xbf16> to vector<64x128xbf16>
    %cst = arith.constant dense<0.000000e+00> : vector<32x128xf32>
    %3 = tpu.matmul %0, %2, %cst {dimension_numbers = #tpu.dot_dimension_numbers<[1], [0], [0], [1], [0, 0, 1, 1], [], []>} : vector<32x64xbf16>, vector<64x128xbf16>, vector<32x128xf32> -> vector<32x128xf32>
    %c1 = arith.constant 1 : index
    %c0_4 = arith.constant 0 : index
    %c0_5 = arith.constant 0 : index
    %4 = vector.load %arg2[%c1, %c0_4, %c0_5] : memref<3x64x128xbf16, #tpu.memory_space<vmem>>, vector<1x64x128xbf16>
    %5 = vector.shape_cast %4 : vector<1x64x128xbf16> to vector<64x128xbf16>
    %cst_6 = arith.constant dense<0.000000e+00> : vector<32x128xf32>
    %6 = tpu.matmul %0, %5, %cst_6 {dimension_numbers = #tpu.dot_dimension_numbers<[1], [0], [0], [1], [0, 0, 1, 1], [], []>} : vector<32x64xbf16>, vector<64x128xbf16>, vector<32x128xf32> -> vector<32x128xf32>
    %c2 = arith.constant 2 : index
    %c0_7 = arith.constant 0 : index
    %c0_8 = arith.constant 0 : index
    %7 = vector.load %arg2[%c2, %c0_7, %c0_8] : memref<3x64x128xbf16, #tpu.memory_space<vmem>>, vector<1x64x128xbf16>
    %8 = vector.shape_cast %7 : vector<1x64x128xbf16> to vector<64x128xbf16>
    %cst_9 = arith.constant dense<0.000000e+00> : vector<32x128xf32>
    %9 = tpu.matmul %0, %8, %cst_9 {dimension_numbers = #tpu.dot_dimension_numbers<[1], [0], [0], [1], [0, 0, 1, 1], [], []>} : vector<32x64xbf16>, vector<64x128xbf16>, vector<32x128xf32> -> vector<32x128xf32>
    %10 = tpu.iota {dimensions = array<i32: 0>} : vector<32x128xi32>
    %c16_i32 = arith.constant 16 : i32
    %c0_i32 = arith.constant 0 : i32
    %11 = arith.cmpi eq, %c16_i32, %c0_i32 : i32
    %c1_i32 = arith.constant 1 : i32
    %12 = arith.select %11, %c1_i32, %c16_i32 : i32
    %13 = vector.broadcast %12 : i32 to vector<32x128xi32>
    %14 = arith.remsi %10, %13 : vector<32x128xi32>
    %c0_i32_10 = arith.constant 0 : i32
    %15 = vector.broadcast %c0_i32_10 : i32 to vector<32x128xi32>
    %16 = arith.cmpi ne, %14, %15 : vector<32x128xi32>
    %c0_i32_11 = arith.constant 0 : i32
    %17 = vector.broadcast %c0_i32_11 : i32 to vector<32x128xi32>
    %18 = arith.cmpi slt, %14, %17 : vector<32x128xi32>
    %c0_i32_12 = arith.constant 0 : i32
    %19 = arith.cmpi slt, %12, %c0_i32_12 : i32
    %20 = vector.broadcast %19 : i1 to vector<32x128xi1>
    %21 = vector.broadcast %20 : vector<32x128xi1> to vector<32x128xi1>
    %22 = arith.xori %18, %21 : vector<32x128xi1>
    %23 = arith.andi %22, %16 : vector<32x128xi1>
    %24 = vector.broadcast %12 : i32 to vector<32x128xi32>
    %25 = arith.addi %14, %24 : vector<32x128xi32>
    %26 = arith.select %23, %25, %14 : vector<32x128xi1>, vector<32x128xi32>
    %c1_i32_13 = arith.constant 1 : i32
    %27 = vector.broadcast %c1_i32_13 : i32 to vector<32x128xi32>
    %28 = arith.cmpi sge, %26, %27 : vector<32x128xi32>
    %c1_i32_14 = arith.constant 1 : i32
    %29 = tpu.dynamic_rotate %3 by %c1_i32_14 dim 0 : vector<32x128xf32>, i32 -> vector<32x128xf32>
    %cst_15 = arith.constant 0.000000e+00 : f32
    %30 = vector.broadcast %cst_15 : f32 to vector<32x128xf32>
    %31 = arith.select %28, %29, %30 : vector<32x128xi1>, vector<32x128xf32>
    %c14_i32 = arith.constant 14 : i32
    %32 = vector.broadcast %c14_i32 : i32 to vector<32x128xi32>
    %33 = arith.cmpi sle, %26, %32 : vector<32x128xi32>
    %c31_i32 = arith.constant 31 : i32
    %34 = tpu.dynamic_rotate %9 by %c31_i32 dim 0 : vector<32x128xf32>, i32 -> vector<32x128xf32>
    %cst_16 = arith.constant 0.000000e+00 : f32
    %35 = vector.broadcast %cst_16 : f32 to vector<32x128xf32>
    %36 = arith.select %33, %34, %35 : vector<32x128xi1>, vector<32x128xf32>
    %37 = arith.addf %6, %31 : vector<32x128xf32>
    %38 = arith.addf %37, %36 : vector<32x128xf32>
    %c0_17 = arith.constant 0 : index
    %c0_18 = arith.constant 0 : index
    %39 = vector.load %arg3[%c0_17, %c0_18] : memref<1x128xf32, #tpu.memory_space<vmem>>, vector<1x128xf32>
    %40 = vector.broadcast %39 : vector<1x128xf32> to vector<32x128xf32>
    %41 = arith.addf %38, %40 : vector<32x128xf32>
    %cst_19 = arith.constant 0.000000e+00 : f32
    %42 = vector.broadcast %cst_19 : f32 to vector<32x128xf32>
    %43 = arith.maximumf %41, %42 : vector<32x128xf32>
    %44 = arith.truncf %43 : vector<32x128xf32> to vector<32x128xbf16>
    %c0_20 = arith.constant 0 : index
    %c0_21 = arith.constant 0 : index
    %c0_22 = arith.constant 0 : index
    %45 = vector.load %arg4[%c0_20, %c0_21, %c0_22] : memref<3x128x128xbf16, #tpu.memory_space<vmem>>, vector<1x128x128xbf16>
    %46 = vector.shape_cast %45 : vector<1x128x128xbf16> to vector<128x128xbf16>
    %cst_23 = arith.constant dense<0.000000e+00> : vector<32x128xf32>
    %47 = tpu.matmul %44, %46, %cst_23 {dimension_numbers = #tpu.dot_dimension_numbers<[1], [0], [0], [1], [0, 0, 1, 1], [], []>} : vector<32x128xbf16>, vector<128x128xbf16>, vector<32x128xf32> -> vector<32x128xf32>
    %c1_24 = arith.constant 1 : index
    %c0_25 = arith.constant 0 : index
    %c0_26 = arith.constant 0 : index
    %48 = vector.load %arg4[%c1_24, %c0_25, %c0_26] : memref<3x128x128xbf16, #tpu.memory_space<vmem>>, vector<1x128x128xbf16>
    %49 = vector.shape_cast %48 : vector<1x128x128xbf16> to vector<128x128xbf16>
    %cst_27 = arith.constant dense<0.000000e+00> : vector<32x128xf32>
    %50 = tpu.matmul %44, %49, %cst_27 {dimension_numbers = #tpu.dot_dimension_numbers<[1], [0], [0], [1], [0, 0, 1, 1], [], []>} : vector<32x128xbf16>, vector<128x128xbf16>, vector<32x128xf32> -> vector<32x128xf32>
    %c2_28 = arith.constant 2 : index
    %c0_29 = arith.constant 0 : index
    %c0_30 = arith.constant 0 : index
    %51 = vector.load %arg4[%c2_28, %c0_29, %c0_30] : memref<3x128x128xbf16, #tpu.memory_space<vmem>>, vector<1x128x128xbf16>
    %52 = vector.shape_cast %51 : vector<1x128x128xbf16> to vector<128x128xbf16>
    %cst_31 = arith.constant dense<0.000000e+00> : vector<32x128xf32>
    %53 = tpu.matmul %44, %52, %cst_31 {dimension_numbers = #tpu.dot_dimension_numbers<[1], [0], [0], [1], [0, 0, 1, 1], [], []>} : vector<32x128xbf16>, vector<128x128xbf16>, vector<32x128xf32> -> vector<32x128xf32>
    %54 = tpu.iota {dimensions = array<i32: 0>} : vector<32x128xi32>
    %c16_i32_32 = arith.constant 16 : i32
    %c0_i32_33 = arith.constant 0 : i32
    %55 = arith.cmpi eq, %c16_i32_32, %c0_i32_33 : i32
    %c1_i32_34 = arith.constant 1 : i32
    %56 = arith.select %55, %c1_i32_34, %c16_i32_32 : i32
    %57 = vector.broadcast %56 : i32 to vector<32x128xi32>
    %58 = arith.remsi %54, %57 : vector<32x128xi32>
    %c0_i32_35 = arith.constant 0 : i32
    %59 = vector.broadcast %c0_i32_35 : i32 to vector<32x128xi32>
    %60 = arith.cmpi ne, %58, %59 : vector<32x128xi32>
    %c0_i32_36 = arith.constant 0 : i32
    %61 = vector.broadcast %c0_i32_36 : i32 to vector<32x128xi32>
    %62 = arith.cmpi slt, %58, %61 : vector<32x128xi32>
    %c0_i32_37 = arith.constant 0 : i32
    %63 = arith.cmpi slt, %56, %c0_i32_37 : i32
    %64 = vector.broadcast %63 : i1 to vector<32x128xi1>
    %65 = vector.broadcast %64 : vector<32x128xi1> to vector<32x128xi1>
    %66 = arith.xori %62, %65 : vector<32x128xi1>
    %67 = arith.andi %66, %60 : vector<32x128xi1>
    %68 = vector.broadcast %56 : i32 to vector<32x128xi32>
    %69 = arith.addi %58, %68 : vector<32x128xi32>
    %70 = arith.select %67, %69, %58 : vector<32x128xi1>, vector<32x128xi32>
    %c1_i32_38 = arith.constant 1 : i32
    %71 = vector.broadcast %c1_i32_38 : i32 to vector<32x128xi32>
    %72 = arith.cmpi sge, %70, %71 : vector<32x128xi32>
    %c1_i32_39 = arith.constant 1 : i32
    %73 = tpu.dynamic_rotate %47 by %c1_i32_39 dim 0 : vector<32x128xf32>, i32 -> vector<32x128xf32>
    %cst_40 = arith.constant 0.000000e+00 : f32
    %74 = vector.broadcast %cst_40 : f32 to vector<32x128xf32>
    %75 = arith.select %72, %73, %74 : vector<32x128xi1>, vector<32x128xf32>
    %c14_i32_41 = arith.constant 14 : i32
    %76 = vector.broadcast %c14_i32_41 : i32 to vector<32x128xi32>
    %77 = arith.cmpi sle, %70, %76 : vector<32x128xi32>
    %c31_i32_42 = arith.constant 31 : i32
    %78 = tpu.dynamic_rotate %53 by %c31_i32_42 dim 0 : vector<32x128xf32>, i32 -> vector<32x128xf32>
    %cst_43 = arith.constant 0.000000e+00 : f32
    %79 = vector.broadcast %cst_43 : f32 to vector<32x128xf32>
    %80 = arith.select %77, %78, %79 : vector<32x128xi1>, vector<32x128xf32>
    %81 = arith.addf %50, %75 : vector<32x128xf32>
    %82 = arith.addf %81, %80 : vector<32x128xf32>
    %c0_44 = arith.constant 0 : index
    %c0_45 = arith.constant 0 : index
    %83 = vector.load %arg5[%c0_44, %c0_45] : memref<1x128xf32, #tpu.memory_space<vmem>>, vector<1x128xf32>
    %84 = vector.broadcast %83 : vector<1x128xf32> to vector<32x128xf32>
    %85 = arith.addf %82, %84 : vector<32x128xf32>
    %cst_46 = arith.constant 0.000000e+00 : f32
    %86 = vector.broadcast %cst_46 : f32 to vector<32x128xf32>
    %87 = arith.maximumf %85, %86 : vector<32x128xf32>
    %c0_47 = arith.constant 0 : index
    %c0_48 = arith.constant 0 : index
    %88 = vector.load %arg8[%c0_47, %c0_48] : memref<32x128xf32, #tpu.memory_space<vmem>>, vector<32x128xf32>
    tpu.vector_store %arg8[%c0_47, %c0_48], %87 {strides = array<i32>} : memref<32x128xf32, #tpu.memory_space<vmem>>, vector<32x128xf32>,
    %c120_i32 = arith.constant 120 : i32
    %89 = tpu.dynamic_rotate %87 by %c120_i32 dim 1 : vector<32x128xf32>, i32 -> vector<32x128xf32>
    %90 = arith.maximumf %87, %89 : vector<32x128xf32>
    %c31_i32_49 = arith.constant 31 : i32
    %91 = tpu.dynamic_rotate %90 by %c31_i32_49 dim 0 : vector<32x128xf32>, i32 -> vector<32x128xf32>
    %92 = arith.maximumf %90, %91 : vector<32x128xf32>
    %c0_50 = arith.constant 0 : index
    %c0_51 = arith.constant 0 : index
    %93 = vector.load %arg6[%c0_50, %c0_51] : memref<128x128xf32, #tpu.memory_space<vmem>>, vector<128x128xf32>
    %cst_52 = arith.constant dense<0.000000e+00> : vector<32x128xf32>
    %94 = tpu.matmul %92, %93, %cst_52 {dimension_numbers = #tpu.dot_dimension_numbers<[1], [0], [0], [1], [0, 0, 1, 1], [], []>} : vector<32x128xf32>, vector<128x128xf32>, vector<32x128xf32> -> vector<32x128xf32>
    %95 = tpu.iota {dimensions = array<i32: 1>} : vector<32x128xi32>
    %c30_i32 = arith.constant 30 : i32
    %96 = tpu.dynamic_rotate %94 by %c30_i32 dim 0 : vector<32x128xf32>, i32 -> vector<32x128xf32>
    %c64_i32 = arith.constant 64 : i32
    %97 = vector.broadcast %c64_i32 : i32 to vector<32x128xi32>
    %98 = arith.cmpi sge, %95, %97 : vector<32x128xi32>
    %99 = arith.select %98, %96, %94 : vector<32x128xi1>, vector<32x128xf32>
    %c0_53 = arith.constant 0 : index
    %c0_54 = arith.constant 0 : index
    %100 = vector.load %arg7[%c0_53, %c0_54] : memref<8x32xf32, #tpu.memory_space<vmem>>, vector<8x32xf32>
    %cst_55 = arith.constant dense<0.000000e+00> : vector<8x128xf32>
    %101 = tpu.matmul %100, %99, %cst_55 {dimension_numbers = #tpu.dot_dimension_numbers<[1], [0], [0], [1], [0, 0, 1, 1], [], []>} : vector<8x32xf32>, vector<32x128xf32>, vector<8x128xf32> -> vector<8x128xf32>
    %c0_56 = arith.constant 0 : index
    %c0_57 = arith.constant 0 : index
    %102 = vector.load %arg9[%c0_56, %c0_57] : memref<8x128xf32, #tpu.memory_space<vmem>>, vector<8x128xf32>
    tpu.vector_store %arg9[%c0_56, %c0_57], %101 {strides = array<i32>} : memref<8x128xf32, #tpu.memory_space<vmem>>, vector<8x128xf32>,
    return
  }
  func.func @transform_0(%arg0: i32) -> (i32, i32) {
    %c0_i32 = arith.constant 0 : i32
    %c0_i32_0 = arith.constant 0 : i32
    return %arg0, %c0_i32 : i32, i32
  }
  func.func @transform_1(%arg0: i32) -> (i32, i32, i32) {
    %c0_i32 = arith.constant 0 : i32
    %c0_i32_0 = arith.constant 0 : i32
    %c0_i32_1 = arith.constant 0 : i32
    %c0_i32_2 = arith.constant 0 : i32
    return %c0_i32, %c0_i32_0, %c0_i32_1 : i32, i32, i32
  }
  func.func @transform_2(%arg0: i32) -> (i32, i32) {
    %c0_i32 = arith.constant 0 : i32
    %c0_i32_0 = arith.constant 0 : i32
    %c0_i32_1 = arith.constant 0 : i32
    return %c0_i32, %c0_i32_0 : i32, i32
  }
  func.func @transform_3(%arg0: i32) -> (i32, i32, i32) {
    %c0_i32 = arith.constant 0 : i32
    %c0_i32_0 = arith.constant 0 : i32
    %c0_i32_1 = arith.constant 0 : i32
    %c0_i32_2 = arith.constant 0 : i32
    return %c0_i32, %c0_i32_0, %c0_i32_1 : i32, i32, i32
  }
  func.func @transform_4(%arg0: i32) -> (i32, i32) {
    %c0_i32 = arith.constant 0 : i32
    %c0_i32_0 = arith.constant 0 : i32
    %c0_i32_1 = arith.constant 0 : i32
    return %c0_i32, %c0_i32_0 : i32, i32
  }
  func.func @transform_5(%arg0: i32) -> (i32, i32) {
    %c0_i32 = arith.constant 0 : i32
    %c0_i32_0 = arith.constant 0 : i32
    %c0_i32_1 = arith.constant 0 : i32
    return %c0_i32, %c0_i32_0 : i32, i32
  }
  func.func @transform_6(%arg0: i32) -> (i32, i32) {
    %c0_i32 = arith.constant 0 : i32
    %c0_i32_0 = arith.constant 0 : i32
    %c0_i32_1 = arith.constant 0 : i32
    return %c0_i32, %c0_i32_0 : i32, i32
  }
  func.func @transform_7(%arg0: i32) -> (i32, i32) {
    %c0_i32 = arith.constant 0 : i32
    %c0_i32_0 = arith.constant 0 : i32
    return %arg0, %c0_i32 : i32, i32
  }
  func.func @transform_8(%arg0: i32) -> (i32, i32) {
    %c0_i32 = arith.constant 0 : i32
    %c0_i32_0 = arith.constant 0 : i32
    return %arg0, %c0_i32 : i32, i32
  }
}

</mosaic_0001>

<llo_original>
// kernel: tile.13
$region0: #{tile.13}
  #allocation0 [shape = 's32[1]{0}', space=sflag, size = 0x4, scoped, tag = 'scoped memory for tile.13']
  %s0 = inlined_call_operand.vmem [shape: f32[8], index: 0, kind: input, shape index: {}]
  %s1 = inlined_call_operand.vmem [shape: f32[16,8], index: 1, kind: output, shape index: {}]
  // Predicated region
  $region2: #{tile.13} parent=0 // pred_check
    _
  $region3: #{tile.13} parent=0 // pred_check_branch
    %3 = sbr.rel (0) target = $region5
  $region4: #{tile.13} parent=0 // pred_region
    _
  $region5: #{tile.13} parent=0 // pred_fallthru
    _
  %v4 = vld [vmem:[%s0] ss:$0 sm:$0xff]
  %5 = vst [vmem:[%s1] sm:$0xff] %v4
  %s6 = scalar_lea.vmem %s1, 8
  %7 = vst [vmem:[%s6] sm:$0xff] %v4

// kernel: tile.14
$region0: #{tile.14}
  %s0 = inlined_call_operand.vmem [shape: f32[16,8], index: 0, kind: input, shape index: {}]
  %s1 = inlined_call_operand.vmem [shape: f32[1,128], index: 1, kind: output, shape index: {}]
  $region1: #{tile.14} parent=0
    #allocation0 [shape = 'u8[4096]{0}', space=vmem, size = 0x1000, scoped, tag = 'scoped mem for output reshape']
    %v2 = vld [vmem:[%s0] sm:$0x1]
    %vm3 = vcmask 64512
    %4 = vst.msk [vmem:[#allocation0] sm:$0x1] %vm3, %v2
    %s5 = scalar_lea.vmem %s0, 15
    %v6 = vld [vmem:[%s5] sm:$0x1]
    %7 = vrot.lane.b32.xlu0 %v6, 120
    %v8 = vpop.permute.xlu0 %7
    %vm9 = vcmask 1048512
    %10 = vst.msk [vmem:[#allocation0] sm:$0x1] %vm9, %v8
    %s11 = scalar_lea.vmem %s0, 14
    %v12 = vld [vmem:[%s11] sm:$0x1]
    %13 = vrot.lane.b32.xlu0 %v12, 112
    %v14 = vpop.permute.xlu0 %13
    %vm15 = vcmask 982912
    %16 = vst.msk [vmem:[#allocation0] sm:$0x1] %vm15, %v14
    %s17 = scalar_lea.vmem %s0, 13
    %v18 = vld [vmem:[%s17] sm:$0x1]
    %19 = vrot.lane.b32.xlu0 %v18, 104
    %v20 = vpop.permute.xlu0 %19
    %vm21 = vcmask 917312
    %22 = vst.msk [vmem:[#allocation0] sm:$0x1] %vm21, %v20
    %s23 = scalar_lea.vmem %s0, 12
    %v24 = vld [vmem:[%s23] sm:$0x1]
    %25 = vrot.lane.b32.xlu0 %v24, 96
    %v26 = vpop.permute.xlu0 %25
    %vm27 = vcmask 851712
    %28 = vst.msk [vmem:[#allocation0] sm:$0x1] %vm27, %v26
    %s29 = scalar_lea.vmem %s0, 11
    %v30 = vld [vmem:[%s29] sm:$0x1]
    %31 = vrot.lane.b32.xlu0 %v30, 88
    %v32 = vpop.permute.xlu0 %31
    %vm33 = vcmask 786112
    %34 = vst.msk [vmem:[#allocation0] sm:$0x1] %vm33, %v32
    %s35 = scalar_lea.vmem %s0, 10
    %v36 = vld [vmem:[%s35] sm:$0x1]
    %37 = vrot.lane.b32.xlu0 %v36, 80
    %v38 = vpop.permute.xlu0 %37
    %vm39 = vcmask 720512
    %40 = vst.msk [vmem:[#allocation0] sm:$0x1] %vm39, %v38
    %s41 = scalar_lea.vmem %s0, 9
    %v42 = vld [vmem:[%s41] sm:$0x1]
    %43 = vrot.lane.b32.xlu0 %v42, 72
    %v44 = vpop.permute.xlu0 %43
    %vm45 = vcmask 654912
    %46 = vst.msk [vmem:[#allocation0] sm:$0x1] %vm45, %v44
    %s47 = scalar_lea.vmem %s0, 8
    %v48 = vld [vmem:[%s47] sm:$0x1]
    %49 = vrot.lane.b32.xlu0 %v48, 64
    %v50 = vpop.permute.xlu0 %49
    %vm51 = vcmask 589312
    %52 = vst.msk [vmem:[#allocation0] sm:$0x1] %vm51, %v50
    %s53 = scalar_lea.vmem %s0, 7
    %v54 = vld [vmem:[%s53] sm:$0x1]
    %55 = vrot.lane.b32.xlu0 %v54, 56
    %v56 = vpop.permute.xlu0 %55
    %vm57 = vcmask 523712
    %58 = vst.msk [vmem:[#allocation0] sm:$0x1] %vm57, %v56
    %s59 = scalar_lea.vmem %s0, 6
    %v60 = vld [vmem:[%s59] sm:$0x1]
    %61 = vrot.lane.b32.xlu0 %v60, 48
    %v62 = vpop.permute.xlu0 %61
    %vm63 = vcmask 458112
    %64 = vst.msk [vmem:[#allocation0] sm:$0x1] %vm63, %v62
    %s65 = scalar_lea.vmem %s0, 5
    %v66 = vld [vmem:[%s65] sm:$0x1]
    %67 = vrot.lane.b32.xlu0 %v66, 40
    %v68 = vpop.permute.xlu0 %67
    %vm69 = vcmask 392512
    %70 = vst.msk [vmem:[#allocation0] sm:$0x1] %vm69, %v68
    %s71 = scalar_lea.vmem %s0, 4
    %v72 = vld [vmem:[%s71] sm:$0x1]
    %73 = vrot.lane.b32.xlu0 %v72, 32
    %v74 = vpop.permute.xlu0 %73
    %vm75 = vcmask 326912
    %76 = vst.msk [vmem:[#allocation0] sm:$0x1] %vm75, %v74
    %s77 = scalar_lea.vmem %s0, 3
    %v78 = vld [vmem:[%s77] sm:$0x1]
    %79 = vrot.lane.b32.xlu0 %v78, 24
    %v80 = vpop.permute.xlu0 %79
    %vm81 = vcmask 261312
    %82 = vst.msk [vmem:[#allocation0] sm:$0x1] %vm81, %v80
    %s83 = scalar_lea.vmem %s0, 2
    %v84 = vld [vmem:[%s83] sm:$0x1]
    %85 = vrot.lane.b32.xlu0 %v84, 16
    %v86 = vpop.permute.xlu0 %85
    %vm87 = vcmask 195712
    %88 = vst.msk [vmem:[#allocation0] sm:$0x1] %vm87, %v86
    %s89 = scalar_lea.vmem %s0, 1
    %v90 = vld [vmem:[%s89] sm:$0x1]
    %91 = vrot.lane.b32.xlu0 %v90, 8
    %v92 = vpop.permute.xlu0 %91
    %vm93 = vcmask 130112
    %94 = vst.msk [vmem:[#allocation0] sm:$0x1] %vm93, %v92
    %s96 = sshllo.u32 0, 1
    %v98 = vld [vmem:[#allocation0] sm:%s96]
    %s99 = sshllo.u32 0, 1
    %100 = vst [vmem:[%s1] sm:%s99] %v98

// kernel: down_forward.1
$region0: #{down_forward.1}
  #allocation0 [shape = 'u32[]', space=smem, size = 0x4, offset = 0x4, fixed_abs, tag = 'smem constant byte address 0x4 - core index']
  #allocation1 [shape = 'u32[144,128]{1,0:T(1,128)}', space=vmem, size = 0x12000, scoped, tag = 'internal scratch']
  %s0 = inlined_call_operand.vmem [shape: bf16[32,64], index: 0, kind: input, shape index: {}]
  %s1 = inlined_call_operand.vmem [shape: bf16[3,64,128], index: 1, kind: input, shape index: {}]
  %s2 = inlined_call_operand.vmem [shape: f32[1,128], index: 2, kind: input, shape index: {}]
  %s3 = inlined_call_operand.vmem [shape: bf16[3,128,128], index: 3, kind: input, shape index: {}]
  %s4 = inlined_call_operand.vmem [shape: f32[1,128], index: 4, kind: input, shape index: {}]
  %s5 = inlined_call_operand.vmem [shape: f32[128,128], index: 5, kind: input, shape index: {}]
  %s6 = inlined_call_operand.vmem [shape: f32[8,32], index: 6, kind: input, shape index: {}]
  %s7 = inlined_call_operand.vmem [shape: f32[32,128], index: 7, kind: output, shape index: {0}]
  %s8 = inlined_call_operand.vmem [shape: f32[8,128], index: 8, kind: output, shape index: {1}]
  %9 = xla_tuple %s7, %s8
  %s10 = sld [smem:[#allocation0]]
  $region46: #{down_forward.1} parent=0
    _
  %s12 = ssub.s32 1, %s10
  %s13 = scalar_select 0, %s12, %s10
  // Predicated region
  $region2: #{down_forward.1} parent=0 // pred_check
    _
  $region3: #{down_forward.1} parent=0 // pred_check_branch
    %15 = sbr.rel (0) target = $region5
  $region4: #{down_forward.1} parent=0 // pred_region
    _
  $region5: #{down_forward.1} parent=0 // pred_fallthru
    _
  // Predicated region
  $region6: #{down_forward.1} parent=0 // pred_check
    _
  $region7: #{down_forward.1} parent=0 // pred_check_branch
    %17 = sbr.rel (0) target = $region9
  $region8: #{down_forward.1} parent=0 // pred_region
    _
  $region9: #{down_forward.1} parent=0 // pred_fallthru
    _
  // Predicated region
  $region10: #{down_forward.1} parent=0 // pred_check
    _
  $region11: #{down_forward.1} parent=0 // pred_check_branch
    %19 = sbr.rel (0) target = $region13
  $region12: #{down_forward.1} parent=0 // pred_region
    _
  $region13: #{down_forward.1} parent=0 // pred_fallthru
    _
  // Predicated region
  $region14: #{down_forward.1} parent=0 // pred_check
    _
  $region15: #{down_forward.1} parent=0 // pred_check_branch
    %21 = sbr.rel (0) target = $region17
  $region16: #{down_forward.1} parent=0 // pred_region
    _
  $region17: #{down_forward.1} parent=0 // pred_fallthru
    _
  // Predicated region
  $region18: #{down_forward.1} parent=0 // pred_check
    _
  $region19: #{down_forward.1} parent=0 // pred_check_branch
    %23 = sbr.rel (0) target = $region21
  $region20: #{down_forward.1} parent=0 // pred_region
    _
  $region21: #{down_forward.1} parent=0 // pred_fallthru
    _
  // Predicated region
  $region22: #{down_forward.1} parent=0 // pred_check
    _
  $region23: #{down_forward.1} parent=0 // pred_check_branch
    %25 = sbr.rel (0) target = $region25
  $region24: #{down_forward.1} parent=0 // pred_region
    _
  $region25: #{down_forward.1} parent=0 // pred_fallthru
    _
  // Predicated region
  $region26: #{down_forward.1} parent=0 // pred_check
    _
  $region27: #{down_forward.1} parent=0 // pred_check_branch
    %27 = sbr.rel (0) target = $region29
  $region28: #{down_forward.1} parent=0 // pred_region
    _
  $region29: #{down_forward.1} parent=0 // pred_fallthru
    _
  %v29 = vld [vmem:[%s0] sm:$0xf]
  %v30 = vld [vmem:[%s0 + $0x4] sm:$0xf]
  %v31 = vld [vmem:[%s0 + $0x8] sm:$0xf]
  %v32 = vld [vmem:[%s0 + $0xc] sm:$0xf]
  %v33 = vld [vmem:[%s1] sm:$0xf]
  %v34 = vld [vmem:[%s1 + $0x4] sm:$0xf]
  %v35 = vld [vmem:[%s1 + $0x8] sm:$0xf]
  %v36 = vld [vmem:[%s1 + $0xc] sm:$0xf]
  %v37 = vld [vmem:[%s1 + $0x10] sm:$0xf]
  %v38 = vld [vmem:[%s1 + $0x14] sm:$0xf]
  %v39 = vld [vmem:[%s1 + $0x18] sm:$0xf]
  %v40 = vld [vmem:[%s1 + $0x1c] sm:$0xf]
  %v45 = vunpack.c.l.b16 %v29
  %v46 = vunpack.c.l.b16 %v30
  %v47 = vunpack.c.l.b16 %v31
  %v48 = vunpack.c.l.b16 %v32
  %v49 = vpack.c.b16 %v46, %v45
  %v50 = vpack.c.b16 %v48, %v47
  %v59 = vunpack.c.l.b16 %v33
  %v60 = vunpack.c.l.b16 %v34
  %v61 = vunpack.c.l.b16 %v35
  %v62 = vunpack.c.l.b16 %v36
  %v63 = vunpack.c.l.b16 %v37
  %v64 = vunpack.c.l.b16 %v38
  %v65 = vunpack.c.l.b16 %v39
  %v66 = vunpack.c.l.b16 %v40
  %v67 = vpack.c.b16 %v60, %v59
  %v68 = vpack.c.b16 %v62, %v61
  %v69 = vpack.c.b16 %v64, %v63
  %v70 = vpack.c.b16 %v66, %v65
  %vm75 = vcmask 523264
  %v77 = vsel %vm75, %v49, 0
  %v80 = vsel %vm75, %v50, 0
  %82 = vmatprep.subr.bf16.mxu0 0
  %83 = vmatpush1.bf16.msra.mxu0 %v67
  %84 = vmatprep.subr.bf16.mxu0 0
  %85 = vmatpush1.bf16.msra.mxu0 %v68
  %86 = vmatprep.subr.bf16.mxu0 0
  %87 = vmatpush1.bf16.msra.mxu0 %v69
  %88 = vmatprep.subr.bf16.mxu0 0
  %89 = vmatpush1.bf16.msra.mxu0 %v70
  %90 = vmatprep.subr.bf16.mxu0 0
  %91 = vmatpush1.bf16.msra.mxu0 0
  %92 = vmatprep.subr.bf16.mxu0 0
  %93 = vmatpush1.bf16.msra.mxu0 0
  %94 = vmatprep.subr.bf16.mxu0 0
  %95 = vmatpush1.bf16.msra.mxu0 0
  %96 = vmatprep.subr.bf16.mxu0 0
  %97 = vmatpush1.bf16.msra.mxu0 0
  %98 = vmatprep.subr.bf16.mxu0 0
  %99 = vmatpush1.bf16.msra.mxu0 0
  %100 = vmatprep.subr.bf16.mxu0 0
  %101 = vmatpush1.bf16.msra.mxu0 0
  %102 = vmatprep.subr.bf16.mxu0 0
  %103 = vmatpush1.bf16.msra.mxu0 0
  %104 = vmatprep.subr.bf16.mxu0 0
  %105 = vmatpush1.bf16.msra.mxu0 0
  %106 = vmatprep.subr.bf16.mxu0 0
  %107 = vmatpush1.bf16.msra.mxu0 0
  %108 = vmatprep.subr.bf16.mxu0 0
  %109 = vmatpush1.bf16.msra.mxu0 0
  %110 = vmatprep.subr.bf16.mxu0 0
  %111 = vmatpush1.bf16.msra.mxu0 0
  %112 = vmatprep.subr.bf16.mxu0 0
  %113 = vmatpush1.bf16.msra.mxu0 0
  %114 = vmatprep.mubr.bf16.mxu0 0
  %115 = vmatmul.mubr.bf16.gmra.mrb[0].mxu0 %v77
  %v116 = vpop.f32.mrb[0].mxu0
  %v117 = vadd.f32 0.0, %v116
  %v118 = vpop.f32.mrb[0].mxu0
  %v119 = vpop.f32.mrb[0].mxu0
  %v120 = vadd.f32 0.0, %v119
  %v121 = vpop.f32.mrb[0].mxu0
  %122 = vmatprep.mubr.bf16.mxu0 0
  %123 = vmatmul.mubr.bf16.gmra.mrb[0].mxu0 %v80
  %v124 = vpop.f32.mrb[0].mxu0
  %v125 = vadd.f32 0.0, %v124
  %v126 = vpop.f32.mrb[0].mxu0
  %v127 = vpop.f32.mrb[0].mxu0
  %v128 = vadd.f32 0.0, %v127
  %v129 = vpop.f32.mrb[0].mxu0
  %130 = vdwg.mxu0
  %s131 = scalar_lea.vmem %s1, 32
  %v132 = vld [vmem:[%s131] sm:$0xf]
  %v133 = vld [vmem:[%s131 + $0x4] sm:$0xf]
  %v134 = vld [vmem:[%s131 + $0x8] sm:$0xf]
  %v135 = vld [vmem:[%s131 + $0xc] sm:$0xf]
  %v136 = vld [vmem:[%s131 + $0x10] sm:$0xf]
  %v137 = vld [vmem:[%s131 + $0x14] sm:$0xf]
  %v138 = vld [vmem:[%s131 + $0x18] sm:$0xf]
  %v139 = vld [vmem:[%s131 + $0x1c] sm:$0xf]
  %s140 = scalar_lea.vmem %s1, 64
  %v141 = vld [vmem:[%s140] sm:$0xf]
  %v142 = vld [vmem:[%s140 + $0x4] sm:$0xf]
  %v143 = vld [vmem:[%s140 + $0x8] sm:$0xf]
  %v144 = vld [vmem:[%s140 + $0xc] sm:$0xf]
  %v145 = vld [vmem:[%s140 + $0x10] sm:$0xf]
  %v146 = vld [vmem:[%s140 + $0x14] sm:$0xf]
  %v147 = vld [vmem:[%s140 + $0x18] sm:$0xf]
  %v148 = vld [vmem:[%s140 + $0x1c] sm:$0xf]
  %v157 = vunpack.c.l.b16 %v141
  %v158 = vunpack.c.l.b16 %v142
  %v159 = vunpack.c.l.b16 %v143
  %v160 = vunpack.c.l.b16 %v144
  %v161 = vunpack.c.l.b16 %v145
  %v162 = vunpack.c.l.b16 %v146
  %v163 = vunpack.c.l.b16 %v147
  %v164 = vunpack.c.l.b16 %v148
  %v165 = vpack.c.b16 %v158, %v157
  %v166 = vpack.c.b16 %v160, %v159
  %v167 = vpack.c.b16 %v162, %v161
  %v168 = vpack.c.b16 %v164, %v163
  %173 = vmatprep.subr.bf16.mxu0 0
  %174 = vmatpush1.bf16.msra.mxu0 %v165
  %175 = vmatprep.subr.bf16.mxu0 0
  %176 = vmatpush1.bf16.msra.mxu0 %v166
  %177 = vmatprep.subr.bf16.mxu0 0
  %178 = vmatpush1.bf16.msra.mxu0 %v167
  %179 = vmatprep.subr.bf16.mxu0 0
  %180 = vmatpush1.bf16.msra.mxu0 %v168
  %181 = vmatprep.subr.bf16.mxu0 0
  %182 = vmatpush1.bf16.msra.mxu0 0
  %183 = vmatprep.subr.bf16.mxu0 0
  %184 = vmatpush1.bf16.msra.mxu0 0
  %185 = vmatprep.subr.bf16.mxu0 0
  %186 = vmatpush1.bf16.msra.mxu0 0
  %187 = vmatprep.subr.bf16.mxu0 0
  %188 = vmatpush1.bf16.msra.mxu0 0
  %189 = vmatprep.subr.bf16.mxu0 0
  %190 = vmatpush1.bf16.msra.mxu0 0
  %191 = vmatprep.subr.bf16.mxu0 0
  %192 = vmatpush1.bf16.msra.mxu0 0
  %193 = vmatprep.subr.bf16.mxu0 0
  %194 = vmatpush1.bf16.msra.mxu0 0
  %195 = vmatprep.subr.bf16.mxu0 0
  %196 = vmatpush1.bf16.msra.mxu0 0
  %197 = vmatprep.subr.bf16.mxu0 0
  %198 = vmatpush1.bf16.msra.mxu0 0
  %199 = vmatprep.subr.bf16.mxu0 0
  %200 = vmatpush1.bf16.msra.mxu0 0
  %201 = vmatprep.subr.bf16.mxu0 0
  %202 = vmatpush1.bf16.msra.mxu0 0
  %203 = vmatprep.subr.bf16.mxu0 0
  %204 = vmatpush1.bf16.msra.mxu0 0
  %205 = vmatprep.mubr.bf16.mxu0 0
  %206 = vmatmul.mubr.bf16.gmra.mrb[0].mxu0 %v77
  %v207 = vpop.f32.mrb[0].mxu0
  %v208 = vadd.f32 0.0, %v207
  %v209 = vpop.f32.mrb[0].mxu0
  %v210 = vpop.f32.mrb[0].mxu0
  %v211 = vadd.f32 0.0, %v210
  %v212 = vpop.f32.mrb[0].mxu0
  %213 = vmatprep.mubr.bf16.mxu0 0
  %214 = vmatmul.mubr.bf16.gmra.mrb[0].mxu0 %v80
  %v215 = vpop.f32.mrb[0].mxu0
  %v216 = vadd.f32 0.0, %v215
  %v217 = vpop.f32.mrb[0].mxu0
  %v218 = vpop.f32.mrb[0].mxu0
  %v219 = vadd.f32 0.0, %v218
  %v220 = vpop.f32.mrb[0].mxu0
  %221 = vdwg.mxu0
  %v222 = vlaneseq
  %v223 = vshrl.u32 %v222, 7
  %v224 = vadd.s32 %v223, 8
  %v225 = vadd.s32 %v223, 16
  %v226 = vadd.s32 %v223, 24
  %vm227 = vcmp.lt.s32.totalorder %v223, 0
  %v228 = vsub.s32 0, %v223
  %v229 = vsel %vm227, %v228, %v223
  %v230 = vshrl.u32 %v229, 4
  %v231 = vand.u32 %v229, 15
  %v232 = vsub.s32 0, %v231
  %v233 = vsel %vm227, %v232, %v231
  %vm234 = vcmp.lt.s32.totalorder %v224, 0
  %v235 = vsub.s32 0, %v224
  %v236 = vsel %vm234, %v235, %v224
  %v237 = vshrl.u32 %v236, 4
  %v238 = vand.u32 %v236, 15
  %v239 = vsub.s32 0, %v238
  %v240 = vsel %vm234, %v239, %v238
  %vm241 = vcmp.lt.s32.totalorder %v225, 0
  %v242 = vsub.s32 0, %v225
  %v243 = vsel %vm241, %v242, %v225
  %v244 = vshrl.u32 %v243, 4
  %v245 = vand.u32 %v243, 15
  %v246 = vsub.s32 0, %v245
  %v247 = vsel %vm241, %v246, %v245
  %vm248 = vcmp.lt.s32.totalorder %v226, 0
  %v249 = vsub.s32 0, %v226
  %v250 = vsel %vm248, %v249, %v226
  %v251 = vshrl.u32 %v250, 4
  %v252 = vand.u32 %v250, 15
  %v253 = vsub.s32 0, %v252
  %v254 = vsel %vm248, %v253, %v252
  %vm255 = vcmp.ne.s32.totalorder %v233, 0
  %vm256 = vcmp.ne.s32.totalorder %v240, 0
  %vm257 = vcmp.ne.s32.totalorder %v247, 0
  %vm258 = vcmp.ne.s32.totalorder %v254, 0
  %vm259 = vcmp.lt.s32.totalorder %v233, 0
  %vm260 = vcmp.lt.s32.totalorder %v240, 0
  %vm261 = vcmp.lt.s32.totalorder %v247, 0
  %vm262 = vcmp.lt.s32.totalorder %v254, 0
  %vm263 = vmand %vm259, %vm255
  %vm264 = vmand %vm260, %vm256
  %vm265 = vmand %vm261, %vm257
  %vm266 = vmand %vm262, %vm258
  %v267 = vadd.s32 %v233, 16
  %v268 = vadd.s32 %v240, 16
  %v269 = vadd.s32 %v247, 16
  %v270 = vadd.s32 %v254, 16
  %v271 = vsel %vm263, %v267, %v233
  %v272 = vsel %vm264, %v268, %v240
  %v273 = vsel %vm265, %v269, %v247
  %v274 = vsel %vm266, %v270, %v254
  %vm275 = vcmp.ge.s32.totalorder %v271, 1
  %vm276 = vcmp.ge.s32.totalorder %v272, 1
  %vm277 = vcmp.ge.s32.totalorder %v273, 1
  %vm278 = vcmp.ge.s32.totalorder %v274, 1
  %v279 = vrot.slane %v117, 7
  %v280 = vrot.slane %v120, 7
  %v281 = vrot.slane %v125, 7
  %v282 = vrot.slane %v128, 7
  %vm283 = vcmp.lt.s32.totalorder %v223, 1
  %v284 = vsel %vm283, %v281, %v282
  %v285 = vsel %vm283, %v280, %v281
  %v286 = vsel %vm283, %v279, %v280
  %v287 = vsel %vm283, %v282, %v279
  %v288 = vsel %vm275, %v287, 0.0
  %v289 = vsel %vm276, %v286, 0.0
  %v290 = vsel %vm277, %v285, 0.0
  %v291 = vsel %vm278, %v284, 0.0
  %vm292 = vcmp.le.s32.totalorder %v271, 14
  %vm293 = vcmp.le.s32.totalorder %v272, 14
  %vm294 = vcmp.le.s32.totalorder %v273, 14
  %vm295 = vcmp.le.s32.totalorder %v274, 14
  %v296 = vrot.slane %v208, 1
  %v297 = vrot.slane %v211, 1
  %v298 = vrot.slane %v216, 1
  %v299 = vrot.slane %v219, 1
  %vm300 = vcmp.lt.s32.totalorder %v223, 7
  %v301 = vsel %vm300, %v298, %v299
  %v302 = vsel %vm300, %v297, %v298
  %v303 = vsel %vm300, %v296, %v297
  %v304 = vsel %vm300, %v299, %v296
  %v305 = vsel %vm292, %v303, 0.0
  %v306 = vsel %vm293, %v302, 0.0
  %v307 = vsel %vm294, %v301, 0.0
  %v308 = vsel %vm295, %v304, 0.0
  %v317 = vunpack.c.l.b16 %v132
  %v318 = vunpack.c.l.b16 %v133
  %v319 = vunpack.c.l.b16 %v134
  %v320 = vunpack.c.l.b16 %v135
  %v321 = vunpack.c.l.b16 %v136
  %v322 = vunpack.c.l.b16 %v137
  %v323 = vunpack.c.l.b16 %v138
  %v324 = vunpack.c.l.b16 %v139
  %v325 = vpack.c.b16 %v318, %v317
  %v326 = vpack.c.b16 %v320, %v319
  %v327 = vpack.c.b16 %v322, %v321
  %v328 = vpack.c.b16 %v324, %v323
  %333 = vmatprep.subr.bf16.mxu0 0
  %334 = vmatpush1.bf16.msra.mxu0 %v325
  %335 = vmatprep.subr.bf16.mxu0 0
  %336 = vmatpush1.bf16.msra.mxu0 %v326
  %337 = vmatprep.subr.bf16.mxu0 0
  %338 = vmatpush1.bf16.msra.mxu0 %v327
  %339 = vmatprep.subr.bf16.mxu0 0
  %340 = vmatpush1.bf16.msra.mxu0 %v328
  %341 = vmatprep.subr.bf16.mxu0 0
  %342 = vmatpush1.bf16.msra.mxu0 0
  %343 = vmatprep.subr.bf16.mxu0 0
  %344 = vmatpush1.bf16.msra.mxu0 0
  %345 = vmatprep.subr.bf16.mxu0 0
  %346 = vmatpush1.bf16.msra.mxu0 0
  %347 = vmatprep.subr.bf16.mxu0 0
  %348 = vmatpush1.bf16.msra.mxu0 0
  %349 = vmatprep.subr.bf16.mxu0 0
  %350 = vmatpush1.bf16.msra.mxu0 0
  %351 = vmatprep.subr.bf16.mxu0 0
  %352 = vmatpush1.bf16.msra.mxu0 0
  %353 = vmatprep.subr.bf16.mxu0 0
  %354 = vmatpush1.bf16.msra.mxu0 0
  %355 = vmatprep.subr.bf16.mxu0 0
  %356 = vmatpush1.bf16.msra.mxu0 0
  %357 = vmatprep.subr.bf16.mxu0 0
  %358 = vmatpush1.bf16.msra.mxu0 0
  %359 = vmatprep.subr.bf16.mxu0 0
  %360 = vmatpush1.bf16.msra.mxu0 0
  %361 = vmatprep.subr.bf16.mxu0 0
  %362 = vmatpush1.bf16.msra.mxu0 0
  %363 = vmatprep.subr.bf16.mxu0 0
  %364 = vmatpush1.bf16.msra.mxu0 0
  %365 = vmatprep.mubr.bf16.mxu0 0
  %366 = vmatmul.mubr.bf16.gmra.mrb[0].mxu0 %v77
  %v367 = vpop.f32.mrb[0].mxu0
  %v368 = vadd.f32 %v288, %v367
  %v369 = vpop.f32.mrb[0].mxu0
  %v370 = vpop.f32.mrb[0].mxu0
  %v371 = vadd.f32 %v289, %v370
  %v372 = vpop.f32.mrb[0].mxu0
  %373 = vmatprep.mubr.bf16.mxu0 0
  %374 = vmatmul.mubr.bf16.gmra.mrb[0].mxu0 %v80
  %v375 = vpop.f32.mrb[0].mxu0
  %v376 = vadd.f32 %v290, %v375
  %v377 = vpop.f32.mrb[0].mxu0
  %v378 = vpop.f32.mrb[0].mxu0
  %v379 = vadd.f32 %v291, %v378
  %v380 = vpop.f32.mrb[0].mxu0
  %381 = vdwg.mxu0
  %v382 = vadd.f32 %v368, %v305
  %v383 = vadd.f32 %v371, %v306
  %v384 = vadd.f32 %v376, %v307
  %v385 = vadd.f32 %v379, %v308
  %v386 = vld [vmem:[%s2] sm:$0x1]
  %v388 = vlaneseq
  %v389 = vshrl.u32 %v388, 7
  %v390 = vsub.s32 0, %v389
  %v391 = vrot.slane %v386, %v390
  %v393 = vadd.f32 %v382, %v391
  %v394 = vadd.f32 %v383, %v391
  %v395 = vadd.f32 %v384, %v391
  %v396 = vadd.f32 %v385, %v391
  %v397 = vmax.f32 %v393, 0.0
  %v398 = vmax.f32 %v394, 0.0
  %v399 = vmax.f32 %v395, 0.0
  %v400 = vmax.f32 %v396, 0.0
  %v401 = vpack.c.bf16 %v398, %v397
  %v402 = vpack.c.bf16 %v400, %v399
  %v403 = vld [vmem:[%s3] sm:$0xf]
  %v404 = vld [vmem:[%s3 + $0x4] sm:$0xf]
  %v405 = vld [vmem:[%s3 + $0x8] sm:$0xf]
  %v406 = vld [vmem:[%s3 + $0xc] sm:$0xf]
  %v407 = vld [vmem:[%s3 + $0x10] sm:$0xf]
  %v408 = vld [vmem:[%s3 + $0x14] sm:$0xf]
  %v409 = vld [vmem:[%s3 + $0x18] sm:$0xf]
  %v410 = vld [vmem:[%s3 + $0x1c] sm:$0xf]
  %v411 = vld [vmem:[%s3 + $0x20] sm:$0xf]
  %v412 = vld [vmem:[%s3 + $0x24] sm:$0xf]
  %v413 = vld [vmem:[%s3 + $0x28] sm:$0xf]
  %v414 = vld [vmem:[%s3 + $0x2c] sm:$0xf]
  %v415 = vld [vmem:[%s3 + $0x30] sm:$0xf]
  %v416 = vld [vmem:[%s3 + $0x34] sm:$0xf]
  %v417 = vld [vmem:[%s3 + $0x38] sm:$0xf]
  %v418 = vld [vmem:[%s3 + $0x3c] sm:$0xf]
  %v435 = vunpack.c.l.b16 %v403
  %v436 = vunpack.c.l.b16 %v404
  %v437 = vunpack.c.l.b16 %v405
  %v438 = vunpack.c.l.b16 %v406
  %v439 = vunpack.c.l.b16 %v407
  %v440 = vunpack.c.l.b16 %v408
  %v441 = vunpack.c.l.b16 %v409
  %v442 = vunpack.c.l.b16 %v410
  %v443 = vunpack.c.l.b16 %v411
  %v444 = vunpack.c.l.b16 %v412
  %v445 = vunpack.c.l.b16 %v413
  %v446 = vunpack.c.l.b16 %v414
  %v447 = vunpack.c.l.b16 %v415
  %v448 = vunpack.c.l.b16 %v416
  %v449 = vunpack.c.l.b16 %v417
  %v450 = vunpack.c.l.b16 %v418
  %v451 = vpack.c.b16 %v436, %v435
  %v452 = vpack.c.b16 %v438, %v437
  %v453 = vpack.c.b16 %v440, %v439
  %v454 = vpack.c.b16 %v442, %v441
  %v455 = vpack.c.b16 %v444, %v443
  %v456 = vpack.c.b16 %v446, %v445
  %v457 = vpack.c.b16 %v448, %v447
  %v458 = vpack.c.b16 %v450, %v449
  %467 = vmatprep.subr.bf16.mxu0 0
  %468 = vmatpush1.bf16.msra.mxu0 %v451
  %469 = vmatprep.subr.bf16.mxu0 0
  %470 = vmatpush1.bf16.msra.mxu0 %v452
  %471 = vmatprep.subr.bf16.mxu0 0
  %472 = vmatpush1.bf16.msra.mxu0 %v453
  %473 = vmatprep.subr.bf16.mxu0 0
  %474 = vmatpush1.bf16.msra.mxu0 %v454
  %475 = vmatprep.subr.bf16.mxu0 0
  %476 = vmatpush1.bf16.msra.mxu0 %v455
  %477 = vmatprep.subr.bf16.mxu0 0
  %478 = vmatpush1.bf16.msra.mxu0 %v456
  %479 = vmatprep.subr.bf16.mxu0 0
  %480 = vmatpush1.bf16.msra.mxu0 %v457
  %481 = vmatprep.subr.bf16.mxu0 0
  %482 = vmatpush1.bf16.msra.mxu0 %v458
  %483 = vmatprep.subr.bf16.mxu0 0
  %484 = vmatpush1.bf16.msra.mxu0 0
  %485 = vmatprep.subr.bf16.mxu0 0
  %486 = vmatpush1.bf16.msra.mxu0 0
  %487 = vmatprep.subr.bf16.mxu0 0
  %488 = vmatpush1.bf16.msra.mxu0 0
  %489 = vmatprep.subr.bf16.mxu0 0
  %490 = vmatpush1.bf16.msra.mxu0 0
  %491 = vmatprep.subr.bf16.mxu0 0
  %492 = vmatpush1.bf16.msra.mxu0 0
  %493 = vmatprep.subr.bf16.mxu0 0
  %494 = vmatpush1.bf16.msra.mxu0 0
  %495 = vmatprep.subr.bf16.mxu0 0
  %496 = vmatpush1.bf16.msra.mxu0 0
  %497 = vmatprep.subr.bf16.mxu0 0
  %498 = vmatpush1.bf16.msra.mxu0 0
  %499 = vmatprep.mubr.bf16.mxu0 0
  %500 = vmatmul.mubr.bf16.gmra.mrb[0].mxu0 %v401
  %v501 = vpop.f32.mrb[0].mxu0
  %v502 = vadd.f32 0.0, %v501
  %v503 = vpop.f32.mrb[0].mxu0
  %v504 = vpop.f32.mrb[0].mxu0
  %v505 = vadd.f32 0.0, %v504
  %v506 = vpop.f32.mrb[0].mxu0
  %507 = vmatprep.mubr.bf16.mxu0 0
  %508 = vmatmul.mubr.bf16.gmra.mrb[0].mxu0 %v402
  %v509 = vpop.f32.mrb[0].mxu0
  %v510 = vadd.f32 0.0, %v509
  %v511 = vpop.f32.mrb[0].mxu0
  %v512 = vpop.f32.mrb[0].mxu0
  %v513 = vadd.f32 0.0, %v512
  %v514 = vpop.f32.mrb[0].mxu0
  %515 = vdwg.mxu0
  %s516 = scalar_lea.vmem %s3, 64
  %v517 = vld [vmem:[%s516] sm:$0xf]
  %v518 = vld [vmem:[%s516 + $0x4] sm:$0xf]
  %v519 = vld [vmem:[%s516 + $0x8] sm:$0xf]
  %v520 = vld [vmem:[%s516 + $0xc] sm:$0xf]
  %v521 = vld [vmem:[%s516 + $0x10] sm:$0xf]
  %v522 = vld [vmem:[%s516 + $0x14] sm:$0xf]
  %v523 = vld [vmem:[%s516 + $0x18] sm:$0xf]
  %v524 = vld [vmem:[%s516 + $0x1c] sm:$0xf]
  %v525 = vld [vmem:[%s516 + $0x20] sm:$0xf]
  %v526 = vld [vmem:[%s516 + $0x24] sm:$0xf]
  %v527 = vld [vmem:[%s516 + $0x28] sm:$0xf]
  %v528 = vld [vmem:[%s516 + $0x2c] sm:$0xf]
  %v529 = vld [vmem:[%s516 + $0x30] sm:$0xf]
  %v530 = vld [vmem:[%s516 + $0x34] sm:$0xf]
  %v531 = vld [vmem:[%s516 + $0x38] sm:$0xf]
  %v532 = vld [vmem:[%s516 + $0x3c] sm:$0xf]
  %s533 = scalar_lea.vmem %s3, 128
  %v534 = vld [vmem:[%s533] sm:$0xf]
  %v535 = vld [vmem:[%s533 + $0x4] sm:$0xf]
  %v536 = vld [vmem:[%s533 + $0x8] sm:$0xf]
  %v537 = vld [vmem:[%s533 + $0xc] sm:$0xf]
  %v538 = vld [vmem:[%s533 + $0x10] sm:$0xf]
  %v539 = vld [vmem:[%s533 + $0x14] sm:$0xf]
  %v540 = vld [vmem:[%s533 + $0x18] sm:$0xf]
  %v541 = vld [vmem:[%s533 + $0x1c] sm:$0xf]
  %v542 = vld [vmem:[%s533 + $0x20] sm:$0xf]
  %v543 = vld [vmem:[%s533 + $0x24] sm:$0xf]
  %v544 = vld [vmem:[%s533 + $0x28] sm:$0xf]
  %v545 = vld [vmem:[%s533 + $0x2c] sm:$0xf]
  %v546 = vld [vmem:[%s533 + $0x30] sm:$0xf]
  %v547 = vld [vmem:[%s533 + $0x34] sm:$0xf]
  %v548 = vld [vmem:[%s533 + $0x38] sm:$0xf]
  %v549 = vld [vmem:[%s533 + $0x3c] sm:$0xf]
  %v566 = vunpack.c.l.b16 %v534
  %v567 = vunpack.c.l.b16 %v535
  %v568 = vunpack.c.l.b16 %v536
  %v569 = vunpack.c.l.b16 %v537
  %v570 = vunpack.c.l.b16 %v538
  %v571 = vunpack.c.l.b16 %v539
  %v572 = vunpack.c.l.b16 %v540
  %v573 = vunpack.c.l.b16 %v541
  %v574 = vunpack.c.l.b16 %v542
  %v575 = vunpack.c.l.b16 %v543
  %v576 = vunpack.c.l.b16 %v544
  %v577 = vunpack.c.l.b16 %v545
  %v578 = vunpack.c.l.b16 %v546
  %v579 = vunpack.c.l.b16 %v547
  %v580 = vunpack.c.l.b16 %v548
  %v581 = vunpack.c.l.b16 %v549
  %v582 = vpack.c.b16 %v567, %v566
  %v583 = vpack.c.b16 %v569, %v568
  %v584 = vpack.c.b16 %v571, %v570
  %v585 = vpack.c.b16 %v573, %v572
  %v586 = vpack.c.b16 %v575, %v574
  %v587 = vpack.c.b16 %v577, %v576
  %v588 = vpack.c.b16 %v579, %v578
  %v589 = vpack.c.b16 %v581, %v580
  %598 = vmatprep.subr.bf16.mxu0 0
  %599 = vmatpush1.bf16.msra.mxu0 %v582
  %600 = vmatprep.subr.bf16.mxu0 0
  %601 = vmatpush1.bf16.msra.mxu0 %v583
  %602 = vmatprep.subr.bf16.mxu0 0
  %603 = vmatpush1.bf16.msra.mxu0 %v584
  %604 = vmatprep.subr.bf16.mxu0 0
  %605 = vmatpush1.bf16.msra.mxu0 %v585
  %606 = vmatprep.subr.bf16.mxu0 0
  %607 = vmatpush1.bf16.msra.mxu0 %v586
  %608 = vmatprep.subr.bf16.mxu0 0
  %609 = vmatpush1.bf16.msra.mxu0 %v587
  %610 = vmatprep.subr.bf16.mxu0 0
  %611 = vmatpush1.bf16.msra.mxu0 %v588
  %612 = vmatprep.subr.bf16.mxu0 0
  %613 = vmatpush1.bf16.msra.mxu0 %v589
  %614 = vmatprep.subr.bf16.mxu0 0
  %615 = vmatpush1.bf16.msra.mxu0 0
  %616 = vmatprep.subr.bf16.mxu0 0
  %617 = vmatpush1.bf16.msra.mxu0 0
  %618 = vmatprep.subr.bf16.mxu0 0
  %619 = vmatpush1.bf16.msra.mxu0 0
  %620 = vmatprep.subr.bf16.mxu0 0
  %621 = vmatpush1.bf16.msra.mxu0 0
  %622 = vmatprep.subr.bf16.mxu0 0
  %623 = vmatpush1.bf16.msra.mxu0 0
  %624 = vmatprep.subr.bf16.mxu0 0
  %625 = vmatpush1.bf16.msra.mxu0 0
  %626 = vmatprep.subr.bf16.mxu0 0
  %627 = vmatpush1.bf16.msra.mxu0 0
  %628 = vmatprep.subr.bf16.mxu0 0
  %629 = vmatpush1.bf16.msra.mxu0 0
  %630 = vmatprep.mubr.bf16.mxu0 0
  %631 = vmatmul.mubr.bf16.gmra.mrb[0].mxu0 %v401
  %v632 = vpop.f32.mrb[0].mxu0
  %v633 = vadd.f32 0.0, %v632
  %v634 = vpop.f32.mrb[0].mxu0
  %v635 = vpop.f32.mrb[0].mxu0
  %v636 = vadd.f32 0.0, %v635
  %v637 = vpop.f32.mrb[0].mxu0
  %638 = vmatprep.mubr.bf16.mxu0 0
  %639 = vmatmul.mubr.bf16.gmra.mrb[0].mxu0 %v402
  %v640 = vpop.f32.mrb[0].mxu0
  %v641 = vadd.f32 0.0, %v640
  %v642 = vpop.f32.mrb[0].mxu0
  %v643 = vpop.f32.mrb[0].mxu0
  %v644 = vadd.f32 0.0, %v643
  %v645 = vpop.f32.mrb[0].mxu0
  %646 = vdwg.mxu0
  %v647 = vrot.slane %v502, 7
  %v648 = vrot.slane %v505, 7
  %v649 = vrot.slane %v510, 7
  %v650 = vrot.slane %v513, 7
  %v651 = vsel %vm283, %v649, %v650
  %v652 = vsel %vm283, %v648, %v649
  %v653 = vsel %vm283, %v647, %v648
  %v654 = vsel %vm283, %v650, %v647
  %v655 = vsel %vm275, %v654, 0.0
  %v656 = vsel %vm276, %v653, 0.0
  %v657 = vsel %vm277, %v652, 0.0
  %v658 = vsel %vm278, %v651, 0.0
  %v659 = vrot.slane %v633, 1
  %v660 = vrot.slane %v636, 1
  %v661 = vrot.slane %v641, 1
  %v662 = vrot.slane %v644, 1
  %v663 = vsel %vm300, %v661, %v662
  %v664 = vsel %vm300, %v660, %v661
  %v665 = vsel %vm300, %v659, %v660
  %v666 = vsel %vm300, %v662, %v659
  %v667 = vsel %vm292, %v665, 0.0
  %v668 = vsel %vm293, %v664, 0.0
  %v669 = vsel %vm294, %v663, 0.0
  %v670 = vsel %vm295, %v666, 0.0
  %v687 = vunpack.c.l.b16 %v517
  %v688 = vunpack.c.l.b16 %v518
  %v689 = vunpack.c.l.b16 %v519
  %v690 = vunpack.c.l.b16 %v520
  %v691 = vunpack.c.l.b16 %v521
  %v692 = vunpack.c.l.b16 %v522
  %v693 = vunpack.c.l.b16 %v523
  %v694 = vunpack.c.l.b16 %v524
  %v695 = vunpack.c.l.b16 %v525
  %v696 = vunpack.c.l.b16 %v526
  %v697 = vunpack.c.l.b16 %v527
  %v698 = vunpack.c.l.b16 %v528
  %v699 = vunpack.c.l.b16 %v529
  %v700 = vunpack.c.l.b16 %v530
  %v701 = vunpack.c.l.b16 %v531
  %v702 = vunpack.c.l.b16 %v532
  %v703 = vpack.c.b16 %v688, %v687
  %v704 = vpack.c.b16 %v690, %v689
  %v705 = vpack.c.b16 %v692, %v691
  %v706 = vpack.c.b16 %v694, %v693
  %v707 = vpack.c.b16 %v696, %v695
  %v708 = vpack.c.b16 %v698, %v697
  %v709 = vpack.c.b16 %v700, %v699
  %v710 = vpack.c.b16 %v702, %v701
  %719 = vmatprep.subr.bf16.mxu0 0
  %720 = vmatpush1.bf16.msra.mxu0 %v703
  %721 = vmatprep.subr.bf16.mxu0 0
  %722 = vmatpush1.bf16.msra.mxu0 %v704
  %723 = vmatprep.subr.bf16.mxu0 0
  %724 = vmatpush1.bf16.msra.mxu0 %v705
  %725 = vmatprep.subr.bf16.mxu0 0
  %726 = vmatpush1.bf16.msra.mxu0 %v706
  %727 = vmatprep.subr.bf16.mxu0 0
  %728 = vmatpush1.bf16.msra.mxu0 %v707
  %729 = vmatprep.subr.bf16.mxu0 0
  %730 = vmatpush1.bf16.msra.mxu0 %v708
  %731 = vmatprep.subr.bf16.mxu0 0
  %732 = vmatpush1.bf16.msra.mxu0 %v709
  %733 = vmatprep.subr.bf16.mxu0 0
  %734 = vmatpush1.bf16.msra.mxu0 %v710
  %735 = vmatprep.subr.bf16.mxu0 0
  %736 = vmatpush1.bf16.msra.mxu0 0
  %737 = vmatprep.subr.bf16.mxu0 0
  %738 = vmatpush1.bf16.msra.mxu0 0
  %739 = vmatprep.subr.bf16.mxu0 0
  %740 = vmatpush1.bf16.msra.mxu0 0
  %741 = vmatprep.subr.bf16.mxu0 0
  %742 = vmatpush1.bf16.msra.mxu0 0
  %743 = vmatprep.subr.bf16.mxu0 0
  %744 = vmatpush1.bf16.msra.mxu0 0
  %745 = vmatprep.subr.bf16.mxu0 0
  %746 = vmatpush1.bf16.msra.mxu0 0
  %747 = vmatprep.subr.bf16.mxu0 0
  %748 = vmatpush1.bf16.msra.mxu0 0
  %749 = vmatprep.subr.bf16.mxu0 0
  %750 = vmatpush1.bf16.msra.mxu0 0
  %751 = vmatprep.mubr.bf16.mxu0 0
  %752 = vmatmul.mubr.bf16.gmra.mrb[0].mxu0 %v401
  %v753 = vpop.f32.mrb[0].mxu0
  %v754 = vadd.f32 %v655, %v753
  %v755 = vpop.f32.mrb[0].mxu0
  %v756 = vpop.f32.mrb[0].mxu0
  %v757 = vadd.f32 %v656, %v756
  %v758 = vpop.f32.mrb[0].mxu0
  %759 = vmatprep.mubr.bf16.mxu0 0
  %760 = vmatmul.mubr.bf16.gmra.mrb[0].mxu0 %v402
  %v761 = vpop.f32.mrb[0].mxu0
  %v762 = vadd.f32 %v657, %v761
  %v763 = vpop.f32.mrb[0].mxu0
  %v764 = vpop.f32.mrb[0].mxu0
  %v765 = vadd.f32 %v658, %v764
  %v766 = vpop.f32.mrb[0].mxu0
  %767 = vdwg.mxu0
  %v768 = vadd.f32 %v754, %v667
  %v769 = vadd.f32 %v757, %v668
  %v770 = vadd.f32 %v762, %v669
  %v771 = vadd.f32 %v765, %v670
  %v772 = vld [vmem:[%s4] sm:$0x1]
  %v774 = vlaneseq
  %v775 = vshrl.u32 %v774, 7
  %v776 = vsub.s32 0, %v775
  %v777 = vrot.slane %v772, %v776
  %v779 = vadd.f32 %v768, %v777
  %v780 = vadd.f32 %v769, %v777
  %v781 = vadd.f32 %v770, %v777
  %v782 = vadd.f32 %v771, %v777
  %v783 = vmax.f32 %v779, 0.0
  %v784 = vmax.f32 %v780, 0.0
  %v785 = vmax.f32 %v781, 0.0
  %v786 = vmax.f32 %v782, 0.0
  %787 = vst [vmem:[%s7] sm:$0xff] %v783
  %788 = vst [vmem:[%s7 + $0x8] sm:$0xff] %v784
  %789 = vst [vmem:[%s7 + $0x10] sm:$0xff] %v785
  %790 = vst [vmem:[%s7 + $0x18] sm:$0xff] %v786
  %791 = vrot.lane.b32.xlu0 %v783, 120
  %v792 = vpop.permute.xlu0 %791
  %793 = vrot.lane.b32.xlu0 %v784, 120
  %v794 = vpop.permute.xlu0 %793
  %795 = vrot.lane.b32.xlu0 %v785, 120
  %v796 = vpop.permute.xlu0 %795
  %797 = vrot.lane.b32.xlu0 %v786, 120
  %v798 = vpop.permute.xlu0 %797
  %v799 = vmax.f32 %v783, %v792
  %v800 = vmax.f32 %v784, %v794
  %v801 = vmax.f32 %v785, %v796
  %v802 = vmax.f32 %v786, %v798
  %v803 = vrot.slane %v799, 1
  %v804 = vrot.slane %v800, 1
  %v805 = vrot.slane %v801, 1
  %v806 = vrot.slane %v802, 1
  %v807 = vsel %vm300, %v805, %v806
  %v808 = vsel %vm300, %v804, %v805
  %v809 = vsel %vm300, %v803, %v804
  %v810 = vsel %vm300, %v806, %v803
  %v811 = vmax.f32 %v799, %v809
  %v812 = vmax.f32 %v800, %v808
  %v813 = vmax.f32 %v801, %v807
  %v814 = vmax.f32 %v802, %v810
  %v815 = vld [vmem:[%s5] sm:$0xff]
  %v816 = vld [vmem:[%s5 + $0x8] sm:$0xff]
  %v817 = vld [vmem:[%s5 + $0x10] sm:$0xff]
  %v818 = vld [vmem:[%s5 + $0x18] sm:$0xff]
  %v819 = vld [vmem:[%s5 + $0x20] sm:$0xff]
  %v820 = vld [vmem:[%s5 + $0x28] sm:$0xff]
  %v821 = vld [vmem:[%s5 + $0x30] sm:$0xff]
  %v822 = vld [vmem:[%s5 + $0x38] sm:$0xff]
  %v823 = vld [vmem:[%s5 + $0x40] sm:$0xff]
  %v824 = vld [vmem:[%s5 + $0x48] sm:$0xff]
  %v825 = vld [vmem:[%s5 + $0x50] sm:$0xff]
  %v826 = vld [vmem:[%s5 + $0x58] sm:$0xff]
  %v827 = vld [vmem:[%s5 + $0x60] sm:$0xff]
  %v828 = vld [vmem:[%s5 + $0x68] sm:$0xff]
  %v829 = vld [vmem:[%s5 + $0x70] sm:$0xff]
  %v830 = vld [vmem:[%s5 + $0x78] sm:$0xff]
  %831 = vmatprep.subr.mxu0 0.0
  %832 = vmatpush1.msra.mxu0 %v815
  %833 = vmatprep.subr.mxu0 0.0
  %834 = vmatpush1.msra.mxu0 %v816
  %835 = vmatprep.subr.mxu0 0.0
  %836 = vmatpush1.msra.mxu0 %v817
  %837 = vmatprep.subr.mxu0 0.0
  %838 = vmatpush1.msra.mxu0 %v818
  %839 = vmatprep.subr.mxu0 0.0
  %840 = vmatpush1.msra.mxu0 %v819
  %841 = vmatprep.subr.mxu0 0.0
  %842 = vmatpush1.msra.mxu0 %v820
  %843 = vmatprep.subr.mxu0 0.0
  %844 = vmatpush1.msra.mxu0 %v821
  %845 = vmatprep.subr.mxu0 0.0
  %846 = vmatpush1.msra.mxu0 %v822
  %847 = vmatprep.subr.mxu0 0.0
  %848 = vmatpush1.msra.mxu0 %v823
  %849 = vmatprep.subr.mxu0 0.0
  %850 = vmatpush1.msra.mxu0 %v824
  %851 = vmatprep.subr.mxu0 0.0
  %852 = vmatpush1.msra.mxu0 %v825
  %853 = vmatprep.subr.mxu0 0.0
  %854 = vmatpush1.msra.mxu0 %v826
  %855 = vmatprep.subr.mxu0 0.0
  %856 = vmatpush1.msra.mxu0 %v827
  %857 = vmatprep.subr.mxu0 0.0
  %858 = vmatpush1.msra.mxu0 %v828
  %859 = vmatprep.subr.mxu0 0.0
  %860 = vmatpush1.msra.mxu0 %v829
  %861 = vmatprep.subr.mxu0 0.0
  %862 = vmatpush1.msra.mxu0 %v830
  %863 = vmatprep.subr.mxu0 0.0
  %864 = vmatpush1.msra.mxu0 0.0
  %865 = vmatprep.subr.mxu0 0.0
  %866 = vmatpush1.msra.mxu0 0.0
  %867 = vmatprep.subr.mxu0 0.0
  %868 = vmatpush1.msra.mxu0 0.0
  %869 = vmatprep.subr.mxu0 0.0
  %870 = vmatpush1.msra.mxu0 0.0
  %871 = vmatprep.subr.mxu0 0.0
  %872 = vmatpush1.msra.mxu0 0.0
  %873 = vmatprep.subr.mxu0 0.0
  %874 = vmatpush1.msra.mxu0 0.0
  %875 = vmatprep.subr.mxu0 0.0
  %876 = vmatpush1.msra.mxu0 0.0
  %877 = vmatprep.subr.mxu0 0.0
  %878 = vmatpush1.msra.mxu0 0.0
  %879 = vmatprep.subr.mxu0 0.0
  %880 = vmatpush1.msra.mxu0 0.0
  %881 = vmatprep.subr.mxu0 0.0
  %882 = vmatpush1.msra.mxu0 0.0
  %883 = vmatprep.subr.mxu0 0.0
  %884 = vmatpush1.msra.mxu0 0.0
  %885 = vmatprep.subr.mxu0 0.0
  %886 = vmatpush1.msra.mxu0 0.0
  %887 = vmatprep.subr.mxu0 0.0
  %888 = vmatpush1.msra.mxu0 0.0
  %889 = vmatprep.subr.mxu0 0.0
  %890 = vmatpush1.msra.mxu0 0.0
  %891 = vmatprep.subr.mxu0 0.0
  %892 = vmatpush1.msra.mxu0 0.0
  %893 = vmatprep.subr.mxu0 0.0
  %894 = vmatpush1.msra.mxu0 0.0
  %895 = vmatprep.mubr.f32.mxu0 0.0
  %896 = vmatmul.mubr.f32.gmra.mrb[0].mxu0 %v811
  %v897 = vpop.f32.mrb[0].mxu0
  %v898 = vadd.f32 0.0, %v897
  %v899 = vpop.f32.mrb[0].mxu0
  %900 = vmatprep.mubr.f32.mxu0 0.0
  %901 = vmatmul.mubr.f32.gmra.mrb[0].mxu0 %v812
  %v902 = vpop.f32.mrb[0].mxu0
  %v903 = vadd.f32 0.0, %v902
  %v904 = vpop.f32.mrb[0].mxu0
  %905 = vmatprep.mubr.f32.mxu0 0.0
  %906 = vmatmul.mubr.f32.gmra.mrb[0].mxu0 %v813
  %v907 = vpop.f32.mrb[0].mxu0
  %v908 = vadd.f32 0.0, %v907
  %v909 = vpop.f32.mrb[0].mxu0
  %910 = vmatprep.mubr.f32.mxu0 0.0
  %911 = vmatmul.mubr.f32.gmra.mrb[0].mxu0 %v814
  %v912 = vpop.f32.mrb[0].mxu0
  %v913 = vadd.f32 0.0, %v912
  %v914 = vpop.f32.mrb[0].mxu0
  %915 = vdwg.mxu0
  %v916 = vlaneseq
  %v917 = vand.u32 %v916, 127
  %v918 = vrot.slane %v898, 2
  %v919 = vrot.slane %v903, 2
  %v920 = vrot.slane %v908, 2
  %v921 = vrot.slane %v913, 2
  %vm922 = vcmp.lt.s32.totalorder %v223, 6
  %v923 = vsel %vm922, %v920, %v921
  %v924 = vsel %vm922, %v919, %v920
  %v925 = vsel %vm922, %v918, %v919
  %v926 = vsel %vm922, %v921, %v918
  %vm927 = vcmp.ge.s32.totalorder %v917, 64
  %v928 = vsel %vm927, %v925, %v898
  %v929 = vsel %vm927, %v924, %v903
  %v930 = vsel %vm927, %v923, %v908
  %v931 = vsel %vm927, %v926, %v913
  %v932 = vld [vmem:[%s6] sm:$0xff]
  %vm933 = vcmask 261120
  %v935 = vsel %vm933, %v932, 0
  %937 = vmatprep.subr.mxu0 0.0
  %938 = vmatpush1.msra.mxu0 %v928
  %939 = vmatprep.subr.mxu0 0.0
  %940 = vmatpush1.msra.mxu0 %v929
  %941 = vmatprep.subr.mxu0 0.0
  %942 = vmatpush1.msra.mxu0 %v930
  %943 = vmatprep.subr.mxu0 0.0
  %944 = vmatpush1.msra.mxu0 %v931
  %945 = vmatprep.subr.mxu0 0.0
  %946 = vmatpush1.msra.mxu0 0.0
  %947 = vmatprep.subr.mxu0 0.0
  %948 = vmatpush1.msra.mxu0 0.0
  %949 = vmatprep.subr.mxu0 0.0
  %950 = vmatpush1.msra.mxu0 0.0
  %951 = vmatprep.subr.mxu0 0.0
  %952 = vmatpush1.msra.mxu0 0.0
  %953 = vmatprep.subr.mxu0 0.0
  %954 = vmatpush1.msra.mxu0 0.0
  %955 = vmatprep.subr.mxu0 0.0
  %956 = vmatpush1.msra.mxu0 0.0
  %957 = vmatprep.subr.mxu0 0.0
  %958 = vmatpush1.msra.mxu0 0.0
  %959 = vmatprep.subr.mxu0 0.0
  %960 = vmatpush1.msra.mxu0 0.0
  %961 = vmatprep.subr.mxu0 0.0
  %962 = vmatpush1.msra.mxu0 0.0
  %963 = vmatprep.subr.mxu0 0.0
  %964 = vmatpush1.msra.mxu0 0.0
  %965 = vmatprep.subr.mxu0 0.0
  %966 = vmatpush1.msra.mxu0 0.0
  %967 = vmatprep.subr.mxu0 0.0
  %968 = vmatpush1.msra.mxu0 0.0
  %969 = vmatprep.subr.mxu0 0.0
  %970 = vmatpush1.msra.mxu0 0.0
  %971 = vmatprep.subr.mxu0 0.0
  %972 = vmatpush1.msra.mxu0 0.0
  %973 = vmatprep.subr.mxu0 0.0
  %974 = vmatpush1.msra.mxu0 0.0
  %975 = vmatprep.subr.mxu0 0.0
  %976 = vmatpush1.msra.mxu0 0.0
  %977 = vmatprep.subr.mxu0 0.0
  %978 = vmatpush1.msra.mxu0 0.0
  %979 = vmatprep.subr.mxu0 0.0
  %980 = vmatpush1.msra.mxu0 0.0
  %981 = vmatprep.subr.mxu0 0.0
  %982 = vmatpush1.msra.mxu0 0.0
  %983 = vmatprep.subr.mxu0 0.0
  %984 = vmatpush1.msra.mxu0 0.0
  %985 = vmatprep.subr.mxu0 0.0
  %986 = vmatpush1.msra.mxu0 0.0
  %987 = vmatprep.subr.mxu0 0.0
  %988 = vmatpush1.msra.mxu0 0.0
  %989 = vmatprep.subr.mxu0 0.0
  %990 = vmatpush1.msra.mxu0 0.0
  %991 = vmatprep.subr.mxu0 0.0
  %992 = vmatpush1.msra.mxu0 0.0
  %993 = vmatprep.subr.mxu0 0.0
  %994 = vmatpush1.msra.mxu0 0.0
  %995 = vmatprep.subr.mxu0 0.0
  %996 = vmatpush1.msra.mxu0 0.0
  %997 = vmatprep.subr.mxu0 0.0
  %998 = vmatpush1.msra.mxu0 0.0
  %999 = vmatprep.subr.mxu0 0.0
  %1000 = vmatpush1.msra.mxu0 0.0
  %1001 = vmatprep.mubr.f32.mxu0 0.0
  %1002 = vmatmul.mubr.f32.gmra.mrb[0].mxu0 %v935
  %v1003 = vpop.f32.mrb[0].mxu0
  %v1004 = vadd.f32 0.0, %v1003
  %v1005 = vpop.f32.mrb[0].mxu0
  %1006 = vdwg.mxu0
  %1007 = vst [vmem:[%s8] sm:$0xff] %v1004
  // Predicated region
  $region30: #{down_forward.1} parent=0 // pred_check
    _
  $region31: #{down_forward.1} parent=0 // pred_check_branch
    %1009 = sbr.rel (0) target = $region33
  $region32: #{down_forward.1} parent=0 // pred_region
    _
  $region33: #{down_forward.1} parent=0 // pred_fallthru
    _
  // Predicated region
  $region34: #{down_forward.1} parent=0 // pred_check
    _
  $region35: #{down_forward.1} parent=0 // pred_check_branch
    %1011 = sbr.rel (0) target = $region37
  $region36: #{down_forward.1} parent=0 // pred_region
    _
  $region37: #{down_forward.1} parent=0 // pred_fallthru
    _
  // Predicated region
  $region38: #{down_forward.1} parent=0 // pred_check
    _
  $region39: #{down_forward.1} parent=0 // pred_check_branch
    %1013 = sbr.rel (0) target = $region41
  $region40: #{down_forward.1} parent=0 // pred_region
    _
  $region41: #{down_forward.1} parent=0 // pred_fallthru
    _
  // Predicated region
  $region42: #{down_forward.1} parent=0 // pred_check
    _
  $region43: #{down_forward.1} parent=0 // pred_check_branch
    %1015 = sbr.rel (0) target = $region45
  $region44: #{down_forward.1} parent=0 // pred_region
    _
  $region45: #{down_forward.1} parent=0 // pred_fallthru
    _

</llo_original>
